<compile_context>
chip_gen: v5e
topology: v5e:2x2
jax: 0.10.0
libtpu: 0.0.40
codegen_flags: <defaults>
</compile_context>

<pallas_src>
import functools

import jax
import jax.numpy as jnp
from jax import lax
from jax.experimental import pallas as pl
from jax.experimental.pallas import tpu as pltpu


def _dot_nt(a, b):
    """a @ b.T on the MXU with f32 accumulation, without an explicit transpose op."""
    return lax.dot_general(
        a, b, (((1,), (1,)), ((), ())), preferred_element_type=jnp.float32
    )


def _row_lse(logits):
    """Row-wise logsumexp, [R, C] -> [R, 1] (f32)."""
    m = jnp.max(logits, axis=-1, keepdims=True)
    return m + jnp.log(jnp.sum(jnp.exp(logits - m), axis=-1, keepdims=True))


def _bimodal_loss_kernel(x_ref, y_ref, o_ref, *, block_rows, inv_temp,
                         similarity_adjust):
    # Full X / Y are resident in VMEM (constant block index -> fetched once across the
    # grid); the current row block is an aligned in-kernel slice of that same buffer,
    # so no extra HBM traffic or row-block double-buffers are needed.
    i = pl.program_id(0)
    r0 = pl.multiple_of(i * block_rows, block_rows)

    x_all = x_ref[...]                      # [B, D]   (input dtype)
    y_all = y_ref[...]                      # [B, D]
    xb = x_ref[pl.ds(r0, block_rows), :]    # [TB, D]
    yb = y_ref[pl.ds(r0, block_rows), :]    # [TB, D]

    # Row block of the logits in both directions, straight from the MXU:
    #   xsim   rows:  (X Y^T)[blk, :] / T
    #   xsim^T rows:  (Y X^T)[blk, :] / T        (== columns of xsim; no XLU transpose)
    xsim = _dot_nt(xb, y_all) * inv_temp          # [TB, B] f32
    xsim_t = _dot_nt(yb, x_all) * inv_temp        # [TB, B] f32

    lse_x = _row_lse(xsim)                        # [TB, 1]
    lse_y = _row_lse(xsim_t)                      # [TB, 1]

    if similarity_adjust:
        # Soft target rows: softmax((X X^T + Y Y^T) / (2T)) for this row block.
        # The normalized target is never materialized; only the cross terms
        # sum_j t_ij * logits_ij are needed (lse identity).
        s = (_dot_nt(xb, x_all) + _dot_nt(yb, y_all)) * (0.5 * inv_temp)   # [TB, B]
        e = jnp.exp(s - jnp.max(s, axis=-1, keepdims=True))
        inv_z = pl.reciprocal(jnp.sum(e, axis=-1, keepdims=True), approx=True)  # [TB,1]
        cross_x = jnp.sum(e * xsim, axis=-1, keepdims=True) * inv_z
        cross_y = jnp.sum(e * xsim_t, axis=-1, keepdims=True) * inv_z
    else:
        # Hard labels arange(B): cross term is the diagonal  X[i].Y[i] / T  for both
        # directions -> elementwise product of the row blocks, no BxB mask needed.
        diag = jnp.sum(xb.astype(jnp.float32) * yb.astype(jnp.float32),
                       axis=-1, keepdims=True) * inv_temp
        cross_x = diag
        cross_y = diag

    # Per-row contribution to (x_loss + y_loss) / 2.
    o_ref[...] = 0.5 * ((lse_x - cross_x) + (lse_y - cross_y))


def _pick_block_rows(batch):
    """Row-block size: full batch if small, else a 256-aligned divisor (MXU friendly)."""
    if batch <= 256:
        return batch
    for tb in (256, 128, 64, 32, 16, 8):
        if batch % tb == 0:
            return tb
    return batch  # irregular batch: fall back to a single block


def bimodal_contrastive_loss(X, Y, temperature, similarity_adjust=True,
                             loss_flood=None, block_rows=None,
                             vmem_limit_bytes=None):
    """Forward pass of BiModalContractiveLoss; returns a scalar (f32)."""
    B, D = X.shape
    if Y.shape != (B, D):
        raise ValueError(f"X {X.shape} and Y {Y.shape} must have the same shape")
    tb = _pick_block_rows(B) if block_rows is None else int(block_rows)
    if B % tb != 0:
        raise ValueError(f"block_rows={tb} must divide batch size {B}")

    kernel = functools.partial(
        _bimodal_loss_kernel,
        block_rows=tb,
        inv_temp=float(1.0 / temperature),
        similarity_adjust=bool(similarity_adjust),
    )

    cp_kwargs = dict(dimension_semantics=("parallel",))  # v7x: shard row blocks on 2 TCs
    if vmem_limit_bytes is not None:  # raise for large B (respect 64 MiB physical on v7x)
        cp_kwargs["vmem_limit_bytes"] = int(vmem_limit_bytes)

    row_terms = pl.pallas_call(
        kernel,
        out_shape=jax.ShapeDtypeStruct((B, 1), jnp.float32),
        grid=(B // tb,),
        in_specs=[
            pl.BlockSpec((B, D), lambda i: (0, 0)),    # full X (constant index -> 1 DMA)
            pl.BlockSpec((B, D), lambda i: (0, 0)),    # full Y
        ],
        out_specs=pl.BlockSpec((tb, 1), lambda i: (i, 0)),
        compiler_params=pltpu.CompilerParams(**cp_kwargs),
    )(X, Y)

    # Tiny epilogue kept outside the kernel so the grid axis stays fully parallel.
    loss = jnp.mean(row_terms)
    if loss_flood:  # matches the module's `if not self.loss_flood:` truthiness exactly
        loss = jnp.abs(loss - loss_flood) + loss_flood
    return loss


def _reference_loss(X, Y, temperature, similarity_adjust=True, loss_flood=None):
    """Pure-JAX reference mirroring the PyTorch module."""
    X = X.astype(jnp.float32)
    Y = Y.astype(jnp.float32)
    B = X.shape[0]
    xsim = (X @ Y.T) / temperature
    if similarity_adjust:
        target = jax.nn.softmax((X @ X.T + Y @ Y.T) / (2.0 * temperature), axis=-1)
    else:
        target = jnp.eye(B, dtype=jnp.float32)

    def soft_ce(logits, tgt):
        logp = jax.nn.log_softmax(logits, axis=-1)
        return -jnp.mean(jnp.sum(tgt * logp, axis=-1))

    # Note: the module uses the UN-transposed target for the transposed-logits loss.
    loss = 0.5 * (soft_ce(xsim, target) + soft_ce(xsim.T, target))
    if loss_flood:
        loss = jnp.abs(loss - loss_flood) + loss_flood
    return loss


def _make_inputs(key, B, D, dtype=jnp.float32):
    kx, ky = jax.random.split(key)
    X = jax.random.normal(kx, (B, D), dtype=jnp.float32)
    Y = jax.random.normal(ky, (B, D), dtype=jnp.float32)
    # L2-normalize rows (standard for contrastive embeddings; keeps logits O(1)).
    X = X / jnp.linalg.norm(X, axis=-1, keepdims=True)
    Y = Y / jnp.linalg.norm(Y, axis=-1, keepdims=True)
    return X.astype(dtype), Y.astype(dtype)


if __name__ == "__main__":
    temperature = 0.5
    key = jax.random.PRNGKey(0)
    k1, k2, k3 = jax.random.split(key, 3)
    tol = dict(atol=2e-2, rtol=2e-2)   # covers bf16 operands + approx reciprocal

    # 1) similarity-adjusted soft target (module default), f32 inputs, single block.
    X, Y = _make_inputs(k1, 8, 128, jnp.float32)
    loss = jax.block_until_ready(
        bimodal_contrastive_loss(X, Y, temperature, similarity_adjust=True))
    ref = _reference_loss(X, Y, temperature, similarity_adjust=True)
    assert jnp.allclose(loss, ref, **tol), ("soft/f32", loss, ref)

    # 2) hard-label (arange) path with loss flooding, bf16 inputs (MXU-native operands).
    Xb, Yb = _make_inputs(k2, 8, 128, jnp.bfloat16)
    loss_h = jax.block_until_ready(
        bimodal_contrastive_loss(Xb, Yb, temperature, similarity_adjust=False,
                                 loss_flood=3.0))
    ref_h = _reference_loss(Xb, Yb, temperature, similarity_adjust=False, loss_flood=3.0)
    assert jnp.allclose(loss_h, ref_h, **tol), ("hard/bf16/flood", loss_h, ref_h)

    # 3) multi-block grid path (B=256 -> two 128-row blocks), f32, soft target.
    X2, Y2 = _make_inputs(k3, 256, 128, jnp.float32)
    loss_g = jax.block_until_ready(
        bimodal_contrastive_loss(X2, Y2, temperature, similarity_adjust=True,
                                 block_rows=128))
    ref_g = _reference_loss(X2, Y2, temperature, similarity_adjust=True)
    assert jnp.allclose(loss_g, ref_g, **tol), ("soft/f32/gridded", loss_g, ref_g)

    print("KERNEL_OK")
</pallas_src>

<mosaic_0001>
module attributes {stable_mosaic.version = 11 : i64} {
  func.func @_bimodal_loss_kernel(%arg0: i32, %arg1: memref<8x128xf32, #tpu.memory_space<vmem>>, %arg2: memref<8x128xf32, #tpu.memory_space<vmem>>, %arg3: memref<8x1xf32, #tpu.memory_space<vmem>>) attributes {dimension_semantics = [#tpu.dimension_semantics<parallel>], iteration_bounds = array<i64: 1>, scalar_prefetch = 0 : i64, scratch_operands = 0 : i64, tpu.core_type = #tpu.core_type<tc>, window_params = [{pipeline_mode = #tpu.pipeline_mode<synchronous>, transform_indices = @transform_0, window_bounds = array<i64: 8, 128>}, {pipeline_mode = #tpu.pipeline_mode<synchronous>, transform_indices = @transform_1, window_bounds = array<i64: 8, 128>}, {transform_indices = @transform_2, window_bounds = array<i64: 8, 1>}]} {
    %c8_i32 = arith.constant 8 : i32
    %0 = arith.muli %arg0, %c8_i32 : i32
    %1 = tpu.assume_multiple %0, 8 : i32
    %c0 = arith.constant 0 : index
    %c0_0 = arith.constant 0 : index
    %2 = vector.load %arg1[%c0, %c0_0] : memref<8x128xf32, #tpu.memory_space<vmem>>, vector<8x128xf32>
    %c0_1 = arith.constant 0 : index
    %c0_2 = arith.constant 0 : index
    %3 = vector.load %arg2[%c0_1, %c0_2] : memref<8x128xf32, #tpu.memory_space<vmem>>, vector<8x128xf32>
    %4 = arith.index_cast %1 : i32 to index
    %c0_3 = arith.constant 0 : index
    %5 = vector.load %arg1[%4, %c0_3] : memref<8x128xf32, #tpu.memory_space<vmem>>, vector<8x128xf32>
    %6 = arith.index_cast %1 : i32 to index
    %c0_4 = arith.constant 0 : index
    %7 = vector.load %arg2[%6, %c0_4] : memref<8x128xf32, #tpu.memory_space<vmem>>, vector<8x128xf32>
    %cst = arith.constant dense<0.000000e+00> : vector<8x8xf32>
    %8 = tpu.matmul %5, %3, %cst {dimension_numbers = #tpu.dot_dimension_numbers<[1], [1], [0], [0], [0, 0, 1, 0], [], []>} : vector<8x128xf32>, vector<8x128xf32>, vector<8x8xf32> -> vector<8x8xf32>
    %cst_5 = arith.constant 2.000000e+00 : f32
    %9 = vector.broadcast %cst_5 : f32 to vector<8x8xf32>
    %10 = arith.mulf %8, %9 : vector<8x8xf32>
    %cst_6 = arith.constant dense<0.000000e+00> : vector<8x8xf32>
    %11 = tpu.matmul %7, %2, %cst_6 {dimension_numbers = #tpu.dot_dimension_numbers<[1], [1], [0], [0], [0, 0, 1, 0], [], []>} : vector<8x128xf32>, vector<8x128xf32>, vector<8x8xf32> -> vector<8x8xf32>
    %cst_7 = arith.constant 2.000000e+00 : f32
    %12 = vector.broadcast %cst_7 : f32 to vector<8x8xf32>
    %13 = arith.mulf %11, %12 : vector<8x8xf32>
    %cst_8 = arith.constant dense<0xFF800000> : vector<8xf32>
    %14 = vector.multi_reduction <maximumf>, %10, %cst_8 [1] : vector<8x8xf32> to vector<8xf32>
    %15 = vector.shape_cast %14 : vector<8xf32> to vector<8x1xf32>
    %16 = vector.broadcast %15 : vector<8x1xf32> to vector<8x8xf32>
    %17 = arith.subf %10, %16 : vector<8x8xf32>
    %18 = math.exp %17 : vector<8x8xf32>
    %cst_9 = arith.constant dense<0.000000e+00> : vector<8xf32>
    %19 = vector.multi_reduction <add>, %18, %cst_9 [1] : vector<8x8xf32> to vector<8xf32>
    %20 = vector.shape_cast %19 : vector<8xf32> to vector<8x1xf32>
    %21 = math.log %20 : vector<8x1xf32>
    %22 = arith.addf %15, %21 : vector<8x1xf32>
    %cst_10 = arith.constant dense<0xFF800000> : vector<8xf32>
    %23 = vector.multi_reduction <maximumf>, %13, %cst_10 [1] : vector<8x8xf32> to vector<8xf32>
    %24 = vector.shape_cast %23 : vector<8xf32> to vector<8x1xf32>
    %25 = vector.broadcast %24 : vector<8x1xf32> to vector<8x8xf32>
    %26 = arith.subf %13, %25 : vector<8x8xf32>
    %27 = math.exp %26 : vector<8x8xf32>
    %cst_11 = arith.constant dense<0.000000e+00> : vector<8xf32>
    %28 = vector.multi_reduction <add>, %27, %cst_11 [1] : vector<8x8xf32> to vector<8xf32>
    %29 = vector.shape_cast %28 : vector<8xf32> to vector<8x1xf32>
    %30 = math.log %29 : vector<8x1xf32>
    %31 = arith.addf %24, %30 : vector<8x1xf32>
    %cst_12 = arith.constant dense<0.000000e+00> : vector<8x8xf32>
    %32 = tpu.matmul %5, %2, %cst_12 {dimension_numbers = #tpu.dot_dimension_numbers<[1], [1], [0], [0], [0, 0, 1, 0], [], []>} : vector<8x128xf32>, vector<8x128xf32>, vector<8x8xf32> -> vector<8x8xf32>
    %cst_13 = arith.constant dense<0.000000e+00> : vector<8x8xf32>
    %33 = tpu.matmul %7, %3, %cst_13 {dimension_numbers = #tpu.dot_dimension_numbers<[1], [1], [0], [0], [0, 0, 1, 0], [], []>} : vector<8x128xf32>, vector<8x128xf32>, vector<8x8xf32> -> vector<8x8xf32>
    %34 = arith.addf %32, %33 : vector<8x8xf32>
    %cst_14 = arith.constant 1.000000e+00 : f32
    %35 = vector.broadcast %cst_14 : f32 to vector<8x8xf32>
    %36 = arith.mulf %34, %35 : vector<8x8xf32>
    %cst_15 = arith.constant dense<0xFF800000> : vector<8xf32>
    %37 = vector.multi_reduction <maximumf>, %36, %cst_15 [1] : vector<8x8xf32> to vector<8xf32>
    %38 = vector.shape_cast %37 : vector<8xf32> to vector<8x1xf32>
    %39 = vector.broadcast %38 : vector<8x1xf32> to vector<8x8xf32>
    %40 = arith.subf %36, %39 : vector<8x8xf32>
    %41 = math.exp %40 : vector<8x8xf32>
    %cst_16 = arith.constant dense<0.000000e+00> : vector<8xf32>
    %42 = vector.multi_reduction <add>, %41, %cst_16 [1] : vector<8x8xf32> to vector<8xf32>
    %43 = vector.shape_cast %42 : vector<8xf32> to vector<8x1xf32>
    %44 = tpu.reciprocal %43 {approx = true} : vector<8x1xf32> -> vector<8x1xf32>
    %45 = arith.mulf %41, %10 : vector<8x8xf32>
    %cst_17 = arith.constant dense<0.000000e+00> : vector<8xf32>
    %46 = vector.multi_reduction <add>, %45, %cst_17 [1] : vector<8x8xf32> to vector<8xf32>
    %47 = vector.shape_cast %46 : vector<8xf32> to vector<8x1xf32>
    %48 = arith.mulf %47, %44 : vector<8x1xf32>
    %49 = arith.mulf %41, %13 : vector<8x8xf32>
    %cst_18 = arith.constant dense<0.000000e+00> : vector<8xf32>
    %50 = vector.multi_reduction <add>, %49, %cst_18 [1] : vector<8x8xf32> to vector<8xf32>
    %51 = vector.shape_cast %50 : vector<8xf32> to vector<8x1xf32>
    %52 = arith.mulf %51, %44 : vector<8x1xf32>
    %53 = arith.subf %22, %48 : vector<8x1xf32>
    %54 = arith.subf %31, %52 : vector<8x1xf32>
    %55 = arith.addf %53, %54 : vector<8x1xf32>
    %cst_19 = arith.constant 5.000000e-01 : f32
    %56 = vector.broadcast %cst_19 : f32 to vector<8x1xf32>
    %57 = arith.mulf %56, %55 : vector<8x1xf32>
    %c0_20 = arith.constant 0 : index
    %c0_21 = arith.constant 0 : index
    %58 = vector.load %arg3[%c0_20, %c0_21] : memref<8x1xf32, #tpu.memory_space<vmem>>, vector<8x1xf32>
    tpu.vector_store %arg3[%c0_20, %c0_21], %57 {strides = array<i32>} : memref<8x1xf32, #tpu.memory_space<vmem>>, vector<8x1xf32>,
    return
  }
  func.func @transform_0(%arg0: i32) -> (i32, i32) {
    %c0_i32 = arith.constant 0 : i32
    %c0_i32_0 = arith.constant 0 : i32
    %c0_i32_1 = arith.constant 0 : i32
    return %c0_i32, %c0_i32_0 : i32, i32
  }
  func.func @transform_1(%arg0: i32) -> (i32, i32) {
    %c0_i32 = arith.constant 0 : i32
    %c0_i32_0 = arith.constant 0 : i32
    %c0_i32_1 = arith.constant 0 : i32
    return %c0_i32, %c0_i32_0 : i32, i32
  }
  func.func @transform_2(%arg0: i32) -> (i32, i32) {
    %c0_i32 = arith.constant 0 : i32
    %c0_i32_0 = arith.constant 0 : i32
    return %arg0, %c0_i32 : i32, i32
  }
}

</mosaic_0001>

<llo_original>
// kernel: tpu_custom_call.1
$region0: #{tpu_custom_call.1}
  #allocation0 [shape = 'u32[]', space=smem, size = 0x4, offset = 0x4, fixed_abs, tag = 'smem constant byte address 0x4 - core index']
  #allocation1 [shape = 'u32[72,128]{1,0:T(1,128)}', space=vmem, size = 0x9000, scoped, tag = 'internal scratch']
  %s0 = inlined_call_operand.hbm [shape: f32[8,128], index: 0, kind: input, shape index: {}]
  %s1 = inlined_call_operand.hbm [shape: f32[8,128], index: 1, kind: input, shape index: {}]
  %s2 = inlined_call_operand.vmem [shape: f32[8,1], index: 2, kind: output, shape index: {}]
  %s3 = sld [smem:[#allocation0]]
  $region26: #{tpu_custom_call.1} parent=0
    _
  %s5 = ssub.s32 1, %s3
  %s6 = scalar_select 0, %s5, %s3
  $region1: #{tpu_custom_call.1} parent=0
    #allocation2 [shape = 'u8[4096]{0}', space=vmem, size = 0x1000, scoped, tag = 'input window, operand 0, single buffered']
    #allocation3 [shape = 's32[1]{0}', space=sflag, size = 0x4, scoped, tag = 'scoped memory for tpu_custom_call.1']
    #allocation4 [shape = 'u8[4096]{0}', space=vmem, size = 0x1000, scoped, tag = 'input window, operand 1, single buffered']
    #allocation5 [shape = 's32[1]{0}', space=sflag, size = 0x4, scoped, tag = 'scoped memory for tpu_custom_call.1']
    %7 = vsyncpa [#allocation3], 0
    %8 = vsyncpa [#allocation5], 0
    // Predicated region
    $region2: #{tpu_custom_call.1} parent=1 // pred_check
      _
    $region3: #{tpu_custom_call.1} parent=1 // pred_check_branch
      %10 = sbr.rel (0) target = $region5
    $region4: #{tpu_custom_call.1} parent=1 // pred_region
      %12 = vsyncadd [#allocation3], 0
      %s14 = sshll.u32 %s0, 4
      %s15 = int_to_ptr.hbm [resolvable:$true] %s14
      %s16 = sshll.u32 [#allocation2], 4
      %s17 = int_to_ptr.vmem [resolvable:$true] %s16
      %19 = dma.hbm_to_vmem [thread:$0]  %s15, 128, %s17, [#allocation3]
    $region5: #{tpu_custom_call.1} parent=1 // pred_fallthru
      _
    // Predicated region
    $region6: #{tpu_custom_call.1} parent=1 // pred_check
      _
    $region7: #{tpu_custom_call.1} parent=1 // pred_check_branch
      %21 = sbr.rel (0) target = $region9
    $region8: #{tpu_custom_call.1} parent=1 // pred_region
      %23 = vsyncadd [#allocation5], 0
      %s25 = sshll.u32 %s1, 4
      %s26 = int_to_ptr.hbm [resolvable:$true] %s25
      %s27 = sshll.u32 [#allocation4], 4
      %s28 = int_to_ptr.vmem [resolvable:$true] %s27
      %30 = dma.hbm_to_vmem [thread:$0]  %s26, 128, %s28, [#allocation5]
    $region9: #{tpu_custom_call.1} parent=1 // pred_fallthru
      _
    // Predicated region
    $region10: #{tpu_custom_call.1} parent=1 // pred_check
      _
    $region11: #{tpu_custom_call.1} parent=1 // pred_check_branch
      %32 = sbr.rel (0) target = $region13
    $region12: #{tpu_custom_call.1} parent=1 // pred_region
      %34 = dma.done [#allocation3], 128
    $region13: #{tpu_custom_call.1} parent=1 // pred_fallthru
      _
    // Predicated region
    $region14: #{tpu_custom_call.1} parent=1 // pred_check
      _
    $region15: #{tpu_custom_call.1} parent=1 // pred_check_branch
      %36 = sbr.rel (0) target = $region17
    $region16: #{tpu_custom_call.1} parent=1 // pred_region
      %38 = dma.done [#allocation5], 128
    $region17: #{tpu_custom_call.1} parent=1 // pred_fallthru
      _
    %s39 = smul.u32 0, 8
    %v40 = vld [vmem:[#allocation2] sm:$0xff]
    %v41 = vld [vmem:[#allocation4] sm:$0xff]
    %s42 = scalar_lea.vmem [#allocation2], %s39
    %v43 = vld [vmem:[%s42] sm:$0xff]
    %s44 = scalar_lea.vmem [#allocation4], %s39
    %v45 = vld [vmem:[%s44] sm:$0xff]
    %46 = vmatpush.xpose.msra.mxu0 0.0
    %47 = vmatpush.xpose.msra.mxu0 0.0
    %48 = vmatpush.xpose.msra.mxu0 0.0
    %49 = vmatpush.xpose.msra.mxu0 0.0
    %50 = vmatpush.xpose.msra.mxu0 0.0
    %51 = vmatpush.xpose.msra.mxu0 0.0
    %52 = vmatpush.xpose.msra.mxu0 0.0
    %53 = vmatpush.xpose.msra.mxu0 0.0
    %54 = vmatpush.xpose.msra.mxu0 0.0
    %55 = vmatpush.xpose.msra.mxu0 0.0
    %56 = vmatpush.xpose.msra.mxu0 0.0
    %57 = vmatpush.xpose.msra.mxu0 0.0
    %58 = vmatpush.xpose.msra.mxu0 0.0
    %59 = vmatpush.xpose.msra.mxu0 0.0
    %60 = vmatpush.xpose.msra.mxu0 0.0
    %61 = vmatpush.xpose.msra.mxu0 %v41
    %62 = vmatmul.f32.gmra.mxu0 %v43
    %v63 = vpop.f32.mrf.mxu0
    %v64 = vadd.f32 0.0, %v63
    %65 = vdwg.mxu0
    %v66 = vmul.f32 %v64, 2.0
    %67 = vmatpush.xpose.msra.mxu0 0.0
    %68 = vmatpush.xpose.msra.mxu0 0.0
    %69 = vmatpush.xpose.msra.mxu0 0.0
    %70 = vmatpush.xpose.msra.mxu0 0.0
    %71 = vmatpush.xpose.msra.mxu0 0.0
    %72 = vmatpush.xpose.msra.mxu0 0.0
    %73 = vmatpush.xpose.msra.mxu0 0.0
    %74 = vmatpush.xpose.msra.mxu0 0.0
    %75 = vmatpush.xpose.msra.mxu0 0.0
    %76 = vmatpush.xpose.msra.mxu0 0.0
    %77 = vmatpush.xpose.msra.mxu0 0.0
    %78 = vmatpush.xpose.msra.mxu0 0.0
    %79 = vmatpush.xpose.msra.mxu0 0.0
    %80 = vmatpush.xpose.msra.mxu0 0.0
    %81 = vmatpush.xpose.msra.mxu0 0.0
    %82 = vmatpush.xpose.msra.mxu0 %v40
    %83 = vmatmul.f32.gmra.mxu0 %v45
    %v84 = vpop.f32.mrf.mxu0
    %v85 = vadd.f32 0.0, %v84
    %86 = vdwg.mxu0
    %v87 = vmul.f32 %v85, 2.0
    %vm88 = vcmask 64512
    %v89 = vsel %vm88, %v66, -inf
    %90 = vmax.xlane.f32.xlu0 %v89
    %v91 = vpop.xlane.xlu0 %90
    %v92 = vsub.f32 %v66, %v91
    %v93 = vmul.f32 %v92, 1.442695
    %v94 = vpow.pop %v93
    %v95 = vsel %vm88, %v94, 0.0
    %96 = vadd.xlane.f32.xlu0 %v95
    %v97 = vpop.xlane.xlu0 %96
    %v98 = vlog2.pop %v97
    %v99 = vmul.f32 %v98, 0.6931472
    %v100 = vadd.f32 %v91, %v99
    %v101 = vsel %vm88, %v87, -inf
    %102 = vmax.xlane.f32.xlu0 %v101
    %v103 = vpop.xlane.xlu0 %102
    %v104 = vsub.f32 %v87, %v103
    %v105 = vmul.f32 %v104, 1.442695
    %v106 = vpow.pop %v105
    %v107 = vsel %vm88, %v106, 0.0
    %108 = vadd.xlane.f32.xlu0 %v107
    %v109 = vpop.xlane.xlu0 %108
    %v110 = vlog2.pop %v109
    %v111 = vmul.f32 %v110, 0.6931472
    %v112 = vadd.f32 %v103, %v111
    %113 = vmatpush.xpose.msra.mxu0 0.0
    %114 = vmatpush.xpose.msra.mxu0 0.0
    %115 = vmatpush.xpose.msra.mxu0 0.0
    %116 = vmatpush.xpose.msra.mxu0 0.0
    %117 = vmatpush.xpose.msra.mxu0 0.0
    %118 = vmatpush.xpose.msra.mxu0 0.0
    %119 = vmatpush.xpose.msra.mxu0 0.0
    %120 = vmatpush.xpose.msra.mxu0 0.0
    %121 = vmatpush.xpose.msra.mxu0 0.0
    %122 = vmatpush.xpose.msra.mxu0 0.0
    %123 = vmatpush.xpose.msra.mxu0 0.0
    %124 = vmatpush.xpose.msra.mxu0 0.0
    %125 = vmatpush.xpose.msra.mxu0 0.0
    %126 = vmatpush.xpose.msra.mxu0 0.0
    %127 = vmatpush.xpose.msra.mxu0 0.0
    %128 = vmatpush.xpose.msra.mxu0 %v41
    %129 = vmatmul.f32.gmra.mxu0 %v45
    %v130 = vpop.f32.mrf.mxu0
    %v131 = vadd.f32 0.0, %v130
    %132 = vdwg.mxu0
    %133 = vmatpush.xpose.msra.mxu0 0.0
    %134 = vmatpush.xpose.msra.mxu0 0.0
    %135 = vmatpush.xpose.msra.mxu0 0.0
    %136 = vmatpush.xpose.msra.mxu0 0.0
    %137 = vmatpush.xpose.msra.mxu0 0.0
    %138 = vmatpush.xpose.msra.mxu0 0.0
    %139 = vmatpush.xpose.msra.mxu0 0.0
    %140 = vmatpush.xpose.msra.mxu0 0.0
    %141 = vmatpush.xpose.msra.mxu0 0.0
    %142 = vmatpush.xpose.msra.mxu0 0.0
    %143 = vmatpush.xpose.msra.mxu0 0.0
    %144 = vmatpush.xpose.msra.mxu0 0.0
    %145 = vmatpush.xpose.msra.mxu0 0.0
    %146 = vmatpush.xpose.msra.mxu0 0.0
    %147 = vmatpush.xpose.msra.mxu0 0.0
    %148 = vmatpush.xpose.msra.mxu0 %v40
    %149 = vmatmul.f32.gmra.mxu0 %v43
    %v150 = vpop.f32.mrf.mxu0
    %v151 = vadd.f32 %v131, %v150
    %152 = vdwg.mxu0
    %v153 = vsel %vm88, %v151, -inf
    %154 = vmax.xlane.f32.xlu0 %v153
    %v155 = vpop.xlane.xlu0 %154
    %v156 = vsub.f32 %v151, %v155
    %v157 = vmul.f32 %v156, 1.442695
    %v158 = vpow.pop %v157
    %v159 = vsel %vm88, %v158, 0.0
    %160 = vadd.xlane.f32.xlu0 %v159
    %v161 = vpop.xlane.xlu0 %160
    %v162 = vrcp.pop %v161
    %v163 = vmul.f32 %v158, %v66
    %v164 = vsel %vm88, %v163, 0.0
    %165 = vadd.xlane.f32.xlu0 %v164
    %v166 = vpop.xlane.xlu0 %165
    %v167 = vmul.f32 %v166, %v162
    %v168 = vmul.f32 %v158, %v87
    %v169 = vsel %vm88, %v168, 0.0
    %170 = vadd.xlane.f32.xlu0 %v169
    %v171 = vpop.xlane.xlu0 %170
    %v172 = vmul.f32 %v171, %v162
    %v173 = vsub.f32 %v100, %v167
    %v174 = vsub.f32 %v112, %v172
    %v175 = vadd.f32 %v173, %v174
    %v176 = vmul.f32 %v175, 0.5
    %vm177 = vcmask 7168
    %178 = vst.msk [vmem:[%s2] sm:$0xff] %vm177, %v176
    // Predicated region
    $region18: #{tpu_custom_call.1} parent=1 // pred_check
      _
    $region19: #{tpu_custom_call.1} parent=1 // pred_check_branch
      %180 = sbr.rel (0) target = $region21
    $region20: #{tpu_custom_call.1} parent=1 // pred_region
      _
    $region21: #{tpu_custom_call.1} parent=1 // pred_fallthru
      _
    // Predicated region
    $region22: #{tpu_custom_call.1} parent=1 // pred_check
      _
    $region23: #{tpu_custom_call.1} parent=1 // pred_check_branch
      %182 = sbr.rel (0) target = $region25
    $region24: #{tpu_custom_call.1} parent=1 // pred_region
      _
    $region25: #{tpu_custom_call.1} parent=1 // pred_fallthru
      _
    %183 = vsyncpa [#allocation3], 1
    %184 = vsyncpa [#allocation5], 1

</llo_original>
